<compile_context>
chip_gen: v7x
topology: tpu7x:2x2x1
jax: 0.10.0
libtpu: 0.0.40
codegen_flags: <defaults>
</compile_context>

<pallas_src>
import functools

import jax
import jax.numpy as jnp
import numpy as np
from jax.experimental import pallas as pl
from jax.experimental.pallas import tpu as pltpu


def _gst_kernel(x_ref, w1_ref, p_ref, out_ref, *,
                batch, time, tpad, channels, style_dim, num_tokens):
    """Single-invocation kernel (no grid).

    x_ref  : (C, B*Tpad) bf16  zero-padded mel slab; mel[b, c, t] sits at lane
                               b*Tpad + 1 + t (1 left-pad lane and >=1 right-pad
                               lanes inside each 128-multiple batch segment).
    w1_ref : (3*D, C)    bf16  conv1 taps: rows [k*D:(k+1)*D] == w1[:, :, k].
    p_ref  : (3*N+D, D)  f32   cached param slab:
                               rows [0, N)         w2      (N, D)
                               rows [N, 2N)        tokens  (N, D)
                               rows [2N, 2N+D)     b1 in column 0
                               rows [2N+D, 3N+D)   b2 in column 0
    out_ref: (B, D)      f32   style embeddings.
    """
    f32 = jnp.float32
    C, D, N, T = channels, style_dim, num_tokens, time
    L = batch * tpad
    Lc = L - 2            # conv-output lanes: lane j <-> (b, t) with j = b*tpad + t

    # ---- cached params: static, 8-aligned sublane slices of two slabs -------
    w_k0 = w1_ref[pl.ds(0, D), :]                      # (D, C) tap on x[t-1]
    w_k1 = w1_ref[pl.ds(D, D), :]                      # (D, C) tap on x[t]
    w_k2 = w1_ref[pl.ds(2 * D, D), :]                  # (D, C) tap on x[t+1]
    w2m = p_ref[pl.ds(0, N), :]                        # (N, D)
    tok = p_ref[pl.ds(N, N), :]                        # (N, D)
    b1c = p_ref[pl.ds(2 * N, D), pl.ds(0, 1)]          # (D, 1)
    b2c = p_ref[pl.ds(2 * N + D, N), pl.ds(0, 1)]      # (N, 1)

    # ---- in-kernel im2col: three lane-shifted windows of the one slab -------
    x = x_ref[...]                                     # (C, L) bf16, loaded once
    x_m1 = x[:, 0:Lc]          # value at output lane j == slab[:, j]   == x[t-1]
    x_c = x[:, 1:Lc + 1]       #                        == slab[:, j+1] == x[t]
    x_p1 = x[:, 2:Lc + 2]      #                        == slab[:, j+2] == x[t+1]

    # Conv1d(C->D, k=3, pad=1): 3 accumulating bf16 MXU matmuls + VPU bias, ReLU.
    y = (jnp.dot(w_k0, x_m1, preferred_element_type=f32)
         + jnp.dot(w_k1, x_c, preferred_element_type=f32)
         + jnp.dot(w_k2, x_p1, preferred_element_type=f32))        # (D, Lc) f32
    y = jnp.maximum(y + b1c, 0.0)

    # Conv1d(D->N, k=1) + bias.  Everything from here on is f32 (v5e-safe).
    logits = jnp.dot(w2m, y, preferred_element_type=f32) + b2c     # (N, Lc)

    # ---- per-batch softmax over time; batches stay fused on the lane axis ----
    lane = jax.lax.broadcasted_iota(jnp.int32, (batch, Lc), 1)
    start = jax.lax.broadcasted_iota(jnp.int32, (batch, Lc), 0) * tpad
    segT = jnp.where((lane >= start) & (lane < start + T),
                     jnp.float32(1.0), jnp.float32(0.0))           # (B, Lc)
    valid = jnp.sum(segT, axis=0, keepdims=True)                   # (1, Lc)

    # Per-batch max (static unrolled loop; B is small).  Pad lanes excluded.
    neg = jnp.float32(-1e30)
    m_bcast = jnp.zeros((N, Lc), f32)
    for b in range(batch):
        seg_b = segT[b:b + 1, :]                                   # (1, Lc)
        m_b = jnp.max(jnp.where(seg_b > 0.0, logits, neg),
                      axis=1, keepdims=True)                       # (N, 1)
        m_bcast = m_bcast + m_b * seg_b                            # (N, Lc)

    # exp (EUP); pad lanes forced to exactly 0 so they cannot pollute anything.
    e = jnp.exp(jnp.where(valid > 0.0, logits - m_bcast, neg))     # (N, Lc)

    # denom[n, b] = sum_t e[n, b*tpad + t]   (lane contraction on the MXU).
    denom = jax.lax.dot_general(e, segT, (((1,), (1,)), ((), ())),
                                preferred_element_type=f32)        # (N, B)
    inv = pl.reciprocal(denom, approx=True)                        # EUP slot
    inv = inv * (2.0 - denom * inv)                                # Newton -> ~f32
    weights = e * jnp.dot(inv, segT, preferred_element_type=f32)   # (N, Lc)

    # style = einsum('bnt,nd->bd'): sum over t per batch, then over tokens.
    wsum = jax.lax.dot_general(segT, weights, (((1,), (1,)), ((), ())),
                               preferred_element_type=f32)         # (B, N)
    out_ref[...] = jnp.dot(wsum, tok, preferred_element_type=f32)  # (B, D)


def prepare_gst_params(params):
    """One-time parameter packing.  Cache the result; do NOT rebuild per call."""
    w1 = jnp.asarray(params["w1"], jnp.float32)            # (D, C, 3)
    b1 = jnp.asarray(params["b1"], jnp.float32)            # (D,)
    w2 = jnp.asarray(params["w2"], jnp.float32)            # (N, D, 1) or (N, D)
    b2 = jnp.asarray(params["b2"], jnp.float32)            # (N,)
    tokens = jnp.asarray(params["tokens"], jnp.float32)    # (N, D)
    D, C, k = w1.shape
    assert k == 3
    w2_2d = w2[:, :, 0] if w2.ndim == 3 else w2
    N = w2_2d.shape[0]
    assert tokens.shape == (N, D) and w2_2d.shape == (N, D)

    # bf16 conv taps stacked on rows: rows [k*D:(k+1)*D] = w1[:, :, k].
    w1_taps = jnp.concatenate([w1[:, :, 0], w1[:, :, 1], w1[:, :, 2]],
                              axis=0).astype(jnp.bfloat16)            # (3D, C)
    # f32 misc slab (D columns): [w2; tokens; b1 column block; b2 column block].
    b1_blk = jnp.zeros((D, D), jnp.float32).at[:, 0].set(b1)
    b2_blk = jnp.zeros((N, D), jnp.float32).at[:, 0].set(b2)
    misc = jnp.concatenate([w2_2d, tokens, b1_blk, b2_blk], axis=0)   # (3N+D, D)
    return {"w1_taps": w1_taps, "misc": misc}


@jax.jit
def gst_forward(mel_ref, w1_taps, misc):
    """mel_ref: [B, C, T] f32 -> style [B, D] f32, using cached packed params."""
    B, C, T = mel_ref.shape
    D = misc.shape[1]
    N = (misc.shape[0] - D) // 3
    assert w1_taps.shape == (3 * D, C)
    tpad = 128 * pl.cdiv(T + 2, 128)     # per-batch segment: lane-dense, >= T+2
    L = B * tpad
    Lc = L - 2

    # Per-call glue (fuses under jit): one zero-padded lane-dense bf16 slab.
    # mel[b, c, t] -> lane b*tpad + 1 + t.
    x = jnp.transpose(mel_ref, (1, 0, 2))                             # (C, B, T)
    x = jnp.pad(x, ((0, 0), (0, 0), (1, tpad - T - 1)))               # (C, B, tpad)
    x = x.reshape(C, L).astype(jnp.bfloat16)                          # (C, L) bf16

    kernel = functools.partial(
        _gst_kernel, batch=B, time=T, tpad=tpad,
        channels=C, style_dim=D, num_tokens=N)

    cost = pl.CostEstimate(
        flops=int(2 * Lc * (3 * D * C + N * D + 3 * N * B)
                  + 6 * (D + N) * Lc + 2 * B * N * D),
        transcendentals=int(N * Lc + N * B),
        bytes_accessed=int(x.size * 2 + w1_taps.size * 2
                           + misc.size * 4 + B * D * 4),
    )
    vmem = pl.BlockSpec(memory_space=pltpu.MemorySpace.VMEM)
    return pl.pallas_call(
        kernel,
        out_shape=jax.ShapeDtypeStruct((B, D), jnp.float32),
        in_specs=[vmem, vmem, vmem],      # whole arrays, single invocation
        out_specs=vmem,
        cost_estimate=cost,
    )(x, w1_taps, misc)


def global_style_tokens(mel_ref, params):
    """Convenience wrapper (packs params on every call; prefer caching)."""
    prepared = prepare_gst_params(params)
    return gst_forward(mel_ref, prepared["w1_taps"], prepared["misc"])


def reference(mel_ref, params):
    """Pure-JAX reference matching the PyTorch forward pass."""
    w1, b1, w2, b2, tokens = (params["w1"], params["b1"], params["w2"],
                              params["b2"], params["tokens"])
    y = jax.lax.conv_general_dilated(
        mel_ref, w1, window_strides=(1,), padding=[(1, 1)],
        dimension_numbers=("NCH", "OIH", "NCH")) + b1[None, :, None]
    y = jax.nn.relu(y)
    logits = jax.lax.conv_general_dilated(
        y, w2, window_strides=(1,), padding=[(0, 0)],
        dimension_numbers=("NCH", "OIH", "NCH")) + b2[None, :, None]
    weights = jax.nn.softmax(logits, axis=-1)
    return jnp.einsum("bnt,nd->bd", weights, tokens)


if __name__ == "__main__":
    # Small, GANConfig-like sizes: channels=4, style_dim=32, num_style_tokens=8.
    B, C, T = 2, 4, 16
    D, N = 32, 8

    key = jax.random.PRNGKey(0)
    k_mel, k_tok, k_w1, k_b1, k_w2, k_b2 = jax.random.split(key, 6)

    mel = jax.random.normal(k_mel, (B, C, T), dtype=jnp.float32)
    params = {
        "tokens": jax.random.normal(k_tok, (N, D), dtype=jnp.float32),          # nn.Parameter
        "w1": 0.3 * jax.random.normal(k_w1, (D, C, 3), dtype=jnp.float32),       # Conv1d(C, D, 3)
        "b1": 0.1 * jax.random.normal(k_b1, (D,), dtype=jnp.float32),
        "w2": 0.3 * jax.random.normal(k_w2, (N, D, 1), dtype=jnp.float32),       # Conv1d(D, N, 1)
        "b2": 0.1 * jax.random.normal(k_b2, (N,), dtype=jnp.float32),
    }

    prepared = prepare_gst_params(params)          # cached once per parameter set
    out = gst_forward(mel, prepared["w1_taps"], prepared["misc"])
    out = jax.block_until_ready(out)

    ref = jax.block_until_ready(reference(mel, params))
    assert out.shape == (B, D), out.shape
    assert np.allclose(np.asarray(out), np.asarray(ref), atol=1e-3, rtol=1e-3), (
        "mismatch vs reference")

    print("KERNEL_OK")
</pallas_src>

<mosaic_0001>
module attributes {stable_mosaic.version = 11 : i64} {
  func.func @_gst_kernel(%arg0: memref<4x256xbf16, #tpu.memory_space<vmem>>, %arg1: memref<96x4xbf16, #tpu.memory_space<vmem>>, %arg2: memref<56x32xf32, #tpu.memory_space<vmem>>, %arg3: memref<2x32xf32, #tpu.memory_space<vmem>>) attributes {dimension_semantics = [], scalar_prefetch = 0 : i64, scratch_operands = 0 : i64, tpu.core_type = #tpu.core_type<tc>} {
    %c0 = arith.constant 0 : index
    %c0_0 = arith.constant 0 : index
    %0 = vector.load %arg1[%c0, %c0_0] : memref<96x4xbf16, #tpu.memory_space<vmem>>, vector<32x4xbf16>
    %c32 = arith.constant 32 : index
    %c0_1 = arith.constant 0 : index
    %1 = vector.load %arg1[%c32, %c0_1] : memref<96x4xbf16, #tpu.memory_space<vmem>>, vector<32x4xbf16>
    %c64 = arith.constant 64 : index
    %c0_2 = arith.constant 0 : index
    %2 = vector.load %arg1[%c64, %c0_2] : memref<96x4xbf16, #tpu.memory_space<vmem>>, vector<32x4xbf16>
    %c0_3 = arith.constant 0 : index
    %c0_4 = arith.constant 0 : index
    %3 = vector.load %arg2[%c0_3, %c0_4] : memref<56x32xf32, #tpu.memory_space<vmem>>, vector<8x32xf32>
    %c8 = arith.constant 8 : index
    %c0_5 = arith.constant 0 : index
    %4 = vector.load %arg2[%c8, %c0_5] : memref<56x32xf32, #tpu.memory_space<vmem>>, vector<8x32xf32>
    %c16 = arith.constant 16 : index
    %c0_6 = arith.constant 0 : index
    %5 = vector.load %arg2[%c16, %c0_6] : memref<56x32xf32, #tpu.memory_space<vmem>>, vector<32x1xf32>
    %c48 = arith.constant 48 : index
    %c0_7 = arith.constant 0 : index
    %6 = vector.load %arg2[%c48, %c0_7] : memref<56x32xf32, #tpu.memory_space<vmem>>, vector<8x1xf32>
    %c0_8 = arith.constant 0 : index
    %c0_9 = arith.constant 0 : index
    %7 = vector.load %arg0[%c0_8, %c0_9] : memref<4x256xbf16, #tpu.memory_space<vmem>>, vector<4x256xbf16>
    %8 = vector.extract_strided_slice %7 {offsets = [0, 0], sizes = [4, 254], strides = [1, 1]} : vector<4x256xbf16> to vector<4x254xbf16>
    %9 = vector.extract_strided_slice %7 {offsets = [0, 1], sizes = [4, 254], strides = [1, 1]} : vector<4x256xbf16> to vector<4x254xbf16>
    %10 = vector.extract_strided_slice %7 {offsets = [0, 2], sizes = [4, 254], strides = [1, 1]} : vector<4x256xbf16> to vector<4x254xbf16>
    %cst = arith.constant dense<0.000000e+00> : vector<32x254xf32>
    %11 = tpu.matmul %0, %8, %cst {dimension_numbers = #tpu.dot_dimension_numbers<[1], [0], [0], [1], [0, 0, 1, 1], [], []>} : vector<32x4xbf16>, vector<4x254xbf16>, vector<32x254xf32> -> vector<32x254xf32>
    %cst_10 = arith.constant dense<0.000000e+00> : vector<32x254xf32>
    %12 = tpu.matmul %1, %9, %cst_10 {dimension_numbers = #tpu.dot_dimension_numbers<[1], [0], [0], [1], [0, 0, 1, 1], [], []>} : vector<32x4xbf16>, vector<4x254xbf16>, vector<32x254xf32> -> vector<32x254xf32>
    %13 = arith.addf %11, %12 : vector<32x254xf32>
    %cst_11 = arith.constant dense<0.000000e+00> : vector<32x254xf32>
    %14 = tpu.matmul %2, %10, %cst_11 {dimension_numbers = #tpu.dot_dimension_numbers<[1], [0], [0], [1], [0, 0, 1, 1], [], []>} : vector<32x4xbf16>, vector<4x254xbf16>, vector<32x254xf32> -> vector<32x254xf32>
    %15 = arith.addf %13, %14 : vector<32x254xf32>
    %16 = vector.broadcast %5 : vector<32x1xf32> to vector<32x254xf32>
    %17 = arith.addf %15, %16 : vector<32x254xf32>
    %cst_12 = arith.constant 0.000000e+00 : f32
    %18 = vector.broadcast %cst_12 : f32 to vector<32x254xf32>
    %19 = arith.maximumf %17, %18 : vector<32x254xf32>
    %cst_13 = arith.constant dense<0.000000e+00> : vector<8x254xf32>
    %20 = tpu.matmul %3, %19, %cst_13 {dimension_numbers = #tpu.dot_dimension_numbers<[1], [0], [0], [1], [0, 0, 1, 1], [], []>} : vector<8x32xf32>, vector<32x254xf32>, vector<8x254xf32> -> vector<8x254xf32>
    %21 = vector.broadcast %6 : vector<8x1xf32> to vector<8x254xf32>
    %22 = arith.addf %20, %21 : vector<8x254xf32>
    %23 = tpu.iota {dimensions = array<i32: 1>} : vector<2x254xi32>
    %24 = tpu.iota {dimensions = array<i32: 0>} : vector<2x254xi32>
    %c128_i32 = arith.constant 128 : i32
    %25 = vector.broadcast %c128_i32 : i32 to vector<2x254xi32>
    %26 = arith.muli %24, %25 : vector<2x254xi32>
    %27 = arith.cmpi sge, %23, %26 : vector<2x254xi32>
    %c16_i32 = arith.constant 16 : i32
    %28 = vector.broadcast %c16_i32 : i32 to vector<2x254xi32>
    %29 = arith.addi %26, %28 : vector<2x254xi32>
    %30 = arith.cmpi slt, %23, %29 : vector<2x254xi32>
    %31 = arith.andi %27, %30 : vector<2x254xi1>
    %cst_14 = arith.constant 1.000000e+00 : f32
    %cst_15 = arith.constant 0.000000e+00 : f32
    %32 = vector.broadcast %cst_14 : f32 to vector<2x254xf32>
    %33 = vector.broadcast %cst_15 : f32 to vector<2x254xf32>
    %34 = arith.select %31, %32, %33 : vector<2x254xi1>, vector<2x254xf32>
    %cst_16 = arith.constant dense<0.000000e+00> : vector<254xf32>
    %35 = vector.multi_reduction <add>, %34, %cst_16 [0] : vector<2x254xf32> to vector<254xf32>
    %36 = vector.shape_cast %35 : vector<254xf32> to vector<1x254xf32>
    %cst_17 = arith.constant 0.000000e+00 : f32
    %37 = vector.broadcast %cst_17 : f32 to vector<8x254xf32>
    %38 = vector.extract_strided_slice %34 {offsets = [0, 0], sizes = [1, 254], strides = [1, 1]} : vector<2x254xf32> to vector<1x254xf32>
    %cst_18 = arith.constant 0.000000e+00 : f32
    %39 = vector.broadcast %cst_18 : f32 to vector<1x254xf32>
    %40 = arith.cmpf ogt, %38, %39 : vector<1x254xf32>
    %cst_19 = arith.constant -1.000000e+30 : f32
    %41 = vector.shape_cast %40 : vector<1x254xi1> to vector<1x254xi1>
    %42 = vector.broadcast %41 : vector<1x254xi1> to vector<8x254xi1>
    %43 = vector.broadcast %cst_19 : f32 to vector<8x254xf32>
    %44 = arith.select %42, %22, %43 : vector<8x254xi1>, vector<8x254xf32>
    %cst_20 = arith.constant dense<0xFF800000> : vector<8xf32>
    %45 = vector.multi_reduction <maximumf>, %44, %cst_20 [1] : vector<8x254xf32> to vector<8xf32>
    %46 = vector.shape_cast %45 : vector<8xf32> to vector<8x1xf32>
    %47 = vector.broadcast %46 : vector<8x1xf32> to vector<8x254xf32>
    %48 = vector.broadcast %38 : vector<1x254xf32> to vector<8x254xf32>
    %49 = arith.mulf %47, %48 : vector<8x254xf32>
    %50 = arith.addf %37, %49 : vector<8x254xf32>
    %51 = vector.extract_strided_slice %34 {offsets = [1, 0], sizes = [1, 254], strides = [1, 1]} : vector<2x254xf32> to vector<1x254xf32>
    %cst_21 = arith.constant 0.000000e+00 : f32
    %52 = vector.broadcast %cst_21 : f32 to vector<1x254xf32>
    %53 = arith.cmpf ogt, %51, %52 : vector<1x254xf32>
    %cst_22 = arith.constant -1.000000e+30 : f32
    %54 = vector.shape_cast %53 : vector<1x254xi1> to vector<1x254xi1>
    %55 = vector.broadcast %54 : vector<1x254xi1> to vector<8x254xi1>
    %56 = vector.broadcast %cst_22 : f32 to vector<8x254xf32>
    %57 = arith.select %55, %22, %56 : vector<8x254xi1>, vector<8x254xf32>
    %cst_23 = arith.constant dense<0xFF800000> : vector<8xf32>
    %58 = vector.multi_reduction <maximumf>, %57, %cst_23 [1] : vector<8x254xf32> to vector<8xf32>
    %59 = vector.shape_cast %58 : vector<8xf32> to vector<8x1xf32>
    %60 = vector.broadcast %59 : vector<8x1xf32> to vector<8x254xf32>
    %61 = vector.broadcast %51 : vector<1x254xf32> to vector<8x254xf32>
    %62 = arith.mulf %60, %61 : vector<8x254xf32>
    %63 = arith.addf %50, %62 : vector<8x254xf32>
    %cst_24 = arith.constant 0.000000e+00 : f32
    %64 = vector.broadcast %cst_24 : f32 to vector<1x254xf32>
    %65 = arith.cmpf ogt, %36, %64 : vector<1x254xf32>
    %66 = arith.subf %22, %63 : vector<8x254xf32>
    %cst_25 = arith.constant -1.000000e+30 : f32
    %67 = vector.shape_cast %65 : vector<1x254xi1> to vector<1x254xi1>
    %68 = vector.broadcast %67 : vector<1x254xi1> to vector<8x254xi1>
    %69 = vector.broadcast %cst_25 : f32 to vector<8x254xf32>
    %70 = arith.select %68, %66, %69 : vector<8x254xi1>, vector<8x254xf32>
    %71 = math.exp %70 : vector<8x254xf32>
    %cst_26 = arith.constant dense<0.000000e+00> : vector<8x2xf32>
    %72 = tpu.matmul %71, %34, %cst_26 {dimension_numbers = #tpu.dot_dimension_numbers<[1], [1], [0], [0], [0, 0, 1, 0], [], []>} : vector<8x254xf32>, vector<2x254xf32>, vector<8x2xf32> -> vector<8x2xf32>
    %73 = tpu.reciprocal %72 {approx = true} : vector<8x2xf32> -> vector<8x2xf32>
    %74 = arith.mulf %72, %73 : vector<8x2xf32>
    %cst_27 = arith.constant 2.000000e+00 : f32
    %75 = vector.broadcast %cst_27 : f32 to vector<8x2xf32>
    %76 = arith.subf %75, %74 : vector<8x2xf32>
    %77 = arith.mulf %73, %76 : vector<8x2xf32>
    %cst_28 = arith.constant dense<0.000000e+00> : vector<8x254xf32>
    %78 = tpu.matmul %77, %34, %cst_28 {dimension_numbers = #tpu.dot_dimension_numbers<[1], [0], [0], [1], [0, 0, 1, 1], [], []>} : vector<8x2xf32>, vector<2x254xf32>, vector<8x254xf32> -> vector<8x254xf32>
    %79 = arith.mulf %71, %78 : vector<8x254xf32>
    %cst_29 = arith.constant dense<0.000000e+00> : vector<2x8xf32>
    %80 = tpu.matmul %34, %79, %cst_29 {dimension_numbers = #tpu.dot_dimension_numbers<[1], [1], [0], [0], [0, 0, 1, 0], [], []>} : vector<2x254xf32>, vector<8x254xf32>, vector<2x8xf32> -> vector<2x8xf32>
    %cst_30 = arith.constant dense<0.000000e+00> : vector<2x32xf32>
    %81 = tpu.matmul %80, %4, %cst_30 {dimension_numbers = #tpu.dot_dimension_numbers<[1], [0], [0], [1], [0, 0, 1, 1], [], []>} : vector<2x8xf32>, vector<8x32xf32>, vector<2x32xf32> -> vector<2x32xf32>
    %c0_31 = arith.constant 0 : index
    %c0_32 = arith.constant 0 : index
    %82 = vector.load %arg3[%c0_31, %c0_32] : memref<2x32xf32, #tpu.memory_space<vmem>>, vector<2x32xf32>
    tpu.vector_store %arg3[%c0_31, %c0_32], %81 {strides = array<i32>} : memref<2x32xf32, #tpu.memory_space<vmem>>, vector<2x32xf32>,
    return
  }
}

</mosaic_0001>

<llo_original>
// kernel: gst_forward.1
$region0: #{gst_forward.1}
  #allocation0 [shape = 'u32[]', space=smem, size = 0x4, offset = 0x4, fixed_abs, tag = 'smem constant byte address 0x4 - core index']
  #allocation1 [shape = 'u32[144,128]{1,0:T(1,128)}', space=vmem, size = 0x12000, scoped, tag = 'internal scratch']
  %s0 = inlined_call_operand.vmem [shape: bf16[4,256], index: 0, kind: input, shape index: {}]
  %s1 = inlined_call_operand.vmem [shape: bf16[96,4], index: 1, kind: input, shape index: {}]
  %s2 = inlined_call_operand.vmem [shape: f32[56,32], index: 2, kind: input, shape index: {}]
  %s3 = inlined_call_operand.hbm [shape: f32[2,32], index: 3, kind: output, shape index: {}]
  %s4 = sld [smem:[#allocation0]]
  $region22: #{gst_forward.1} parent=0
    _
  %s6 = ssub.s32 1, %s4
  %s7 = scalar_select 0, %s6, %s4
  $region1: #{gst_forward.1} parent=0
    #allocation2 [shape = 'u8[1024]{0}', space=vmem, size = 0x400, scoped, tag = 'output window, operand 0, single buffered']
    #allocation3 [shape = 's32[1]{0}', space=sflag, size = 0x4, scoped, tag = 'scoped memory for gst_forward.1']
    %8 = vsyncpa [#allocation3], 0
    // Predicated region
    $region2: #{gst_forward.1} parent=1 // pred_check
      _
    $region3: #{gst_forward.1} parent=1 // pred_check_branch
      %10 = sbr.rel (0) target = $region5
    $region4: #{gst_forward.1} parent=1 // pred_region
      _
    $region5: #{gst_forward.1} parent=1 // pred_fallthru
      _
    // Predicated region
    $region6: #{gst_forward.1} parent=1 // pred_check
      _
    $region7: #{gst_forward.1} parent=1 // pred_check_branch
      %12 = sbr.rel (0) target = $region9
    $region8: #{gst_forward.1} parent=1 // pred_region
      _
    $region9: #{gst_forward.1} parent=1 // pred_fallthru
      _
    // Predicated region
    $region10: #{gst_forward.1} parent=1 // pred_check
      _
    $region11: #{gst_forward.1} parent=1 // pred_check_branch
      %14 = sbr.rel (0) target = $region13
    $region12: #{gst_forward.1} parent=1 // pred_region
      _
    $region13: #{gst_forward.1} parent=1 // pred_fallthru
      _
    %v16 = vld [vmem:[%s1] sm:$0xf]
    %v17 = vld [vmem:[%s1 + $0x4] sm:$0xf]
    %v18 = vld [vmem:[%s1 + $0x8] sm:$0xf]
    %v19 = vld [vmem:[%s1 + $0xc] sm:$0xf]
    %v20 = vld [vmem:[%s1 + $0x10] sm:$0xf]
    %v21 = vld [vmem:[%s1 + $0x14] sm:$0xf]
    %v22 = vld [vmem:[%s1 + $0x18] sm:$0xf]
    %v23 = vld [vmem:[%s1 + $0x1c] sm:$0xf]
    %v24 = vld [vmem:[%s1 + $0x20] sm:$0xf]
    %v25 = vld [vmem:[%s1 + $0x24] sm:$0xf]
    %v26 = vld [vmem:[%s1 + $0x28] sm:$0xf]
    %v27 = vld [vmem:[%s1 + $0x2c] sm:$0xf]
    %v28 = vld [vmem:[%s2] sm:$0xff]
    %v29 = vld [vmem:[%s2 + $0x8] sm:$0xff]
    %v30 = vld [vmem:[%s2 + $0x10] sm:$0xff]
    %v31 = vld [vmem:[%s2 + $0x18] sm:$0xff]
    %v32 = vld [vmem:[%s2 + $0x20] sm:$0xff]
    %v33 = vld [vmem:[%s2 + $0x28] sm:$0xff]
    %v34 = vld [vmem:[%s2 + $0x30] sm:$0xff]
    %v35 = vld [vmem:[%s0] sm:$0xf]
    %v40 = vunpack.c.l.b16 %v20
    %v41 = vunpack.c.l.b16 %v21
    %v42 = vunpack.c.l.b16 %v22
    %v43 = vunpack.c.l.b16 %v23
    %v44 = vpack.c.b16 %v41, %v40
    %v45 = vpack.c.b16 %v43, %v42
    %v48 = vunpack.c.l.s4 1983009808
    %v49 = vunpack.c.0.s8 %v48
    %v50 = vlaneseq
    %v51 = vshrl.u32 %v50, 7
    %v52 = vsub.s32 %v49, %v51
    %v53 = vrot.slane %v35, %v52
    %v54 = vcombine.high %v53, %v53
    %55 = vrot.lane.b32.xlu0 %v53, 127
    %v56 = vpop.permute.xlu0 %55
    %57 = vrot.lane.b32.xlu0 %v54, 127
    %v58 = vpop.permute.xlu0 %57
    %vm59 = vcmask 1039360
    %v60 = vsel %vm59, %v56, %v58
    %vm61 = vcmask 31744
    %v63 = vsel %vm61, %v44, 0
    %v66 = vsel %vm61, %v45, 0
    %vm68 = vcmask 1041408
    %v70 = vsel %vm68, %v60, 0
    %v73 = vsel %vm68, %v58, 0
    %75 = vmatprep.subr.bf16.mxu0 %v73
    %76 = vmatpush1.bf16.msra.mxu0 %v70
    %77 = vmatprep.subr.bf16.mxu0 0
    %78 = vmatpush1.bf16.msra.mxu0 0
    %79 = vmatprep.subr.bf16.mxu0 0
    %80 = vmatpush1.bf16.msra.mxu0 0
    %81 = vmatprep.subr.bf16.mxu0 0
    %82 = vmatpush1.bf16.msra.mxu0 0
    %83 = vmatprep.subr.bf16.mxu0 0
    %84 = vmatpush1.bf16.msra.mxu0 0
    %85 = vmatprep.subr.bf16.mxu0 0
    %86 = vmatpush1.bf16.msra.mxu0 0
    %87 = vmatprep.subr.bf16.mxu0 0
    %88 = vmatpush1.bf16.msra.mxu0 0
    %89 = vmatprep.subr.bf16.mxu0 0
    %90 = vmatpush1.bf16.msra.mxu0 0
    %91 = vmatprep.subr.bf16.mxu0 0
    %92 = vmatpush1.bf16.msra.mxu0 0
    %93 = vmatprep.subr.bf16.mxu0 0
    %94 = vmatpush1.bf16.msra.mxu0 0
    %95 = vmatprep.subr.bf16.mxu0 0
    %96 = vmatpush1.bf16.msra.mxu0 0
    %97 = vmatprep.subr.bf16.mxu0 0
    %98 = vmatpush1.bf16.msra.mxu0 0
    %99 = vmatprep.subr.bf16.mxu0 0
    %100 = vmatpush1.bf16.msra.mxu0 0
    %101 = vmatprep.subr.bf16.mxu0 0
    %102 = vmatpush1.bf16.msra.mxu0 0
    %103 = vmatprep.subr.bf16.mxu0 0
    %104 = vmatpush1.bf16.msra.mxu0 0
    %105 = vmatprep.subr.bf16.mxu0 0
    %106 = vmatpush1.bf16.msra.mxu0 0
    %107 = vmatprep.mubr.bf16.mxu0 0
    %108 = vmatmul.mubr.bf16.gmra.mrb[0].mxu0 %v63
    %v109 = vpop.f32.mrb[0].mxu0
    %v110 = vadd.f32 0.0, %v109
    %v111 = vpop.f32.mrb[0].mxu0
    %v112 = vadd.f32 0.0, %v111
    %v113 = vpop.f32.mrb[0].mxu0
    %v114 = vadd.f32 0.0, %v113
    %v115 = vpop.f32.mrb[0].mxu0
    %v116 = vadd.f32 0.0, %v115
    %117 = vmatprep.mubr.bf16.mxu0 0
    %118 = vmatmul.mubr.bf16.gmra.mrb[0].mxu0 %v66
    %v119 = vpop.f32.mrb[0].mxu0
    %v120 = vadd.f32 0.0, %v119
    %v121 = vpop.f32.mrb[0].mxu0
    %v122 = vadd.f32 0.0, %v121
    %v123 = vpop.f32.mrb[0].mxu0
    %v124 = vadd.f32 0.0, %v123
    %v125 = vpop.f32.mrb[0].mxu0
    %v126 = vadd.f32 0.0, %v125
    %127 = vdwg.mxu0
    %v132 = vunpack.c.l.b16 %v16
    %v133 = vunpack.c.l.b16 %v17
    %v134 = vunpack.c.l.b16 %v18
    %v135 = vunpack.c.l.b16 %v19
    %v136 = vpack.c.b16 %v133, %v132
    %v137 = vpack.c.b16 %v135, %v134
    %v139 = vsel %vm61, %v136, 0
    %v142 = vsel %vm61, %v137, 0
    %v145 = vsel %vm68, %v53, 0
    %v148 = vsel %vm68, %v54, 0
    %150 = vmatprep.subr.bf16.mxu0 %v148
    %151 = vmatpush1.bf16.msra.mxu0 %v145
    %152 = vmatprep.subr.bf16.mxu0 0
    %153 = vmatpush1.bf16.msra.mxu0 0
    %154 = vmatprep.subr.bf16.mxu0 0
    %155 = vmatpush1.bf16.msra.mxu0 0
    %156 = vmatprep.subr.bf16.mxu0 0
    %157 = vmatpush1.bf16.msra.mxu0 0
    %158 = vmatprep.subr.bf16.mxu0 0
    %159 = vmatpush1.bf16.msra.mxu0 0
    %160 = vmatprep.subr.bf16.mxu0 0
    %161 = vmatpush1.bf16.msra.mxu0 0
    %162 = vmatprep.subr.bf16.mxu0 0
    %163 = vmatpush1.bf16.msra.mxu0 0
    %164 = vmatprep.subr.bf16.mxu0 0
    %165 = vmatpush1.bf16.msra.mxu0 0
    %166 = vmatprep.subr.bf16.mxu0 0
    %167 = vmatpush1.bf16.msra.mxu0 0
    %168 = vmatprep.subr.bf16.mxu0 0
    %169 = vmatpush1.bf16.msra.mxu0 0
    %170 = vmatprep.subr.bf16.mxu0 0
    %171 = vmatpush1.bf16.msra.mxu0 0
    %172 = vmatprep.subr.bf16.mxu0 0
    %173 = vmatpush1.bf16.msra.mxu0 0
    %174 = vmatprep.subr.bf16.mxu0 0
    %175 = vmatpush1.bf16.msra.mxu0 0
    %176 = vmatprep.subr.bf16.mxu0 0
    %177 = vmatpush1.bf16.msra.mxu0 0
    %178 = vmatprep.subr.bf16.mxu0 0
    %179 = vmatpush1.bf16.msra.mxu0 0
    %180 = vmatprep.subr.bf16.mxu0 0
    %181 = vmatpush1.bf16.msra.mxu0 0
    %182 = vmatprep.mubr.bf16.mxu0 0
    %183 = vmatmul.mubr.bf16.gmra.mrb[0].mxu0 %v139
    %v184 = vpop.f32.mrb[0].mxu0
    %v185 = vadd.f32 %v110, %v184
    %v186 = vpop.f32.mrb[0].mxu0
    %v187 = vadd.f32 %v112, %v186
    %v188 = vpop.f32.mrb[0].mxu0
    %v189 = vadd.f32 %v114, %v188
    %v190 = vpop.f32.mrb[0].mxu0
    %v191 = vadd.f32 %v116, %v190
    %192 = vmatprep.mubr.bf16.mxu0 0
    %193 = vmatmul.mubr.bf16.gmra.mrb[0].mxu0 %v142
    %v194 = vpop.f32.mrb[0].mxu0
    %v195 = vadd.f32 %v120, %v194
    %v196 = vpop.f32.mrb[0].mxu0
    %v197 = vadd.f32 %v122, %v196
    %v198 = vpop.f32.mrb[0].mxu0
    %v199 = vadd.f32 %v124, %v198
    %v200 = vpop.f32.mrb[0].mxu0
    %v201 = vadd.f32 %v126, %v200
    %202 = vdwg.mxu0
    %v207 = vunpack.c.l.b16 %v24
    %v208 = vunpack.c.l.b16 %v25
    %v209 = vunpack.c.l.b16 %v26
    %v210 = vunpack.c.l.b16 %v27
    %v211 = vpack.c.b16 %v208, %v207
    %v212 = vpack.c.b16 %v210, %v209
    %213 = vrot.lane.b32.xlu0 %v53, 126
    %v214 = vpop.permute.xlu0 %213
    %215 = vrot.lane.b32.xlu0 %v54, 126
    %v216 = vpop.permute.xlu0 %215
    %vm217 = vcmask 1031168
    %v218 = vsel %vm217, %v214, %v216
    %v220 = vsel %vm61, %v211, 0
    %v223 = vsel %vm61, %v212, 0
    %v226 = vsel %vm68, %v218, 0
    %v229 = vsel %vm68, %v216, 0
    %231 = vmatprep.subr.bf16.mxu0 %v229
    %232 = vmatpush1.bf16.msra.mxu0 %v226
    %233 = vmatprep.subr.bf16.mxu0 0
    %234 = vmatpush1.bf16.msra.mxu0 0
    %235 = vmatprep.subr.bf16.mxu0 0
    %236 = vmatpush1.bf16.msra.mxu0 0
    %237 = vmatprep.subr.bf16.mxu0 0
    %238 = vmatpush1.bf16.msra.mxu0 0
    %239 = vmatprep.subr.bf16.mxu0 0
    %240 = vmatpush1.bf16.msra.mxu0 0
    %241 = vmatprep.subr.bf16.mxu0 0
    %242 = vmatpush1.bf16.msra.mxu0 0
    %243 = vmatprep.subr.bf16.mxu0 0
    %244 = vmatpush1.bf16.msra.mxu0 0
    %245 = vmatprep.subr.bf16.mxu0 0
    %246 = vmatpush1.bf16.msra.mxu0 0
    %247 = vmatprep.subr.bf16.mxu0 0
    %248 = vmatpush1.bf16.msra.mxu0 0
    %249 = vmatprep.subr.bf16.mxu0 0
    %250 = vmatpush1.bf16.msra.mxu0 0
    %251 = vmatprep.subr.bf16.mxu0 0
    %252 = vmatpush1.bf16.msra.mxu0 0
    %253 = vmatprep.subr.bf16.mxu0 0
    %254 = vmatpush1.bf16.msra.mxu0 0
    %255 = vmatprep.subr.bf16.mxu0 0
    %256 = vmatpush1.bf16.msra.mxu0 0
    %257 = vmatprep.subr.bf16.mxu0 0
    %258 = vmatpush1.bf16.msra.mxu0 0
    %259 = vmatprep.subr.bf16.mxu0 0
    %260 = vmatpush1.bf16.msra.mxu0 0
    %261 = vmatprep.subr.bf16.mxu0 0
    %262 = vmatpush1.bf16.msra.mxu0 0
    %263 = vmatprep.mubr.bf16.mxu0 0
    %264 = vmatmul.mubr.bf16.gmra.mrb[0].mxu0 %v220
    %v265 = vpop.f32.mrb[0].mxu0
    %v266 = vadd.f32 0.0, %v265
    %v267 = vpop.f32.mrb[0].mxu0
    %v268 = vadd.f32 0.0, %v267
    %v269 = vpop.f32.mrb[0].mxu0
    %v270 = vadd.f32 0.0, %v269
    %v271 = vpop.f32.mrb[0].mxu0
    %v272 = vadd.f32 0.0, %v271
    %273 = vmatprep.mubr.bf16.mxu0 0
    %274 = vmatmul.mubr.bf16.gmra.mrb[0].mxu0 %v223
    %v275 = vpop.f32.mrb[0].mxu0
    %v276 = vadd.f32 0.0, %v275
    %v277 = vpop.f32.mrb[0].mxu0
    %v278 = vadd.f32 0.0, %v277
    %v279 = vpop.f32.mrb[0].mxu0
    %v280 = vadd.f32 0.0, %v279
    %v281 = vpop.f32.mrb[0].mxu0
    %v282 = vadd.f32 0.0, %v281
    %283 = vdwg.mxu0
    %v284 = vadd.f32 %v185, %v266
    %v285 = vadd.f32 %v187, %v268
    %v286 = vadd.f32 %v189, %v270
    %v287 = vadd.f32 %v191, %v272
    %v288 = vadd.f32 %v195, %v276
    %v289 = vadd.f32 %v197, %v278
    %v290 = vadd.f32 %v199, %v280
    %v291 = vadd.f32 %v201, %v282
    %293 = vset.pattern.permute.xlu0 0
    %294 = vperm.xlu0 %293, %v30
    %v295 = vpop.permute.xlu0 %294
    %298 = vset.pattern.permute.xlu0 0
    %299 = vperm.xlu0 %298, %v31
    %v300 = vpop.permute.xlu0 %299
    %303 = vset.pattern.permute.xlu0 0
    %304 = vperm.xlu0 %303, %v32
    %v305 = vpop.permute.xlu0 %304
    %308 = vset.pattern.permute.xlu0 0
    %309 = vperm.xlu0 %308, %v33
    %v310 = vpop.permute.xlu0 %309
    %v312 = vadd.f32 %v284, %v295
    %v313 = vadd.f32 %v285, %v295
    %v314 = vadd.f32 %v286, %v300
    %v315 = vadd.f32 %v287, %v300
    %v316 = vadd.f32 %v288, %v305
    %v317 = vadd.f32 %v289, %v305
    %v318 = vadd.f32 %v290, %v310
    %v319 = vadd.f32 %v291, %v310
    %v320 = vmax.f32 %v312, 0.0
    %v321 = vmax.f32 %v313, 0.0
    %v322 = vmax.f32 %v314, 0.0
    %v323 = vmax.f32 %v315, 0.0
    %v324 = vmax.f32 %v316, 0.0
    %v325 = vmax.f32 %v317, 0.0
    %v326 = vmax.f32 %v318, 0.0
    %v327 = vmax.f32 %v319, 0.0
    %329 = vset.pattern.permute.xlu0 0
    %330 = vperm.xlu0 %329, %v34
    %v331 = vpop.permute.xlu0 %330
    %vm333 = vcmask 261120
    %v335 = vsel %vm333, %v28, 0
    %337 = vmatprep.subr.mxu0 %v321
    %338 = vmatpush1.msra.mxu0 %v320
    %339 = vmatprep.subr.mxu0 %v323
    %340 = vmatpush1.msra.mxu0 %v322
    %341 = vmatprep.subr.mxu0 %v325
    %342 = vmatpush1.msra.mxu0 %v324
    %343 = vmatprep.subr.mxu0 %v327
    %344 = vmatpush1.msra.mxu0 %v326
    %345 = vmatprep.subr.mxu0 0.0
    %346 = vmatpush1.msra.mxu0 0.0
    %347 = vmatprep.subr.mxu0 0.0
    %348 = vmatpush1.msra.mxu0 0.0
    %349 = vmatprep.subr.mxu0 0.0
    %350 = vmatpush1.msra.mxu0 0.0
    %351 = vmatprep.subr.mxu0 0.0
    %352 = vmatpush1.msra.mxu0 0.0
    %353 = vmatprep.subr.mxu0 0.0
    %354 = vmatpush1.msra.mxu0 0.0
    %355 = vmatprep.subr.mxu0 0.0
    %356 = vmatpush1.msra.mxu0 0.0
    %357 = vmatprep.subr.mxu0 0.0
    %358 = vmatpush1.msra.mxu0 0.0
    %359 = vmatprep.subr.mxu0 0.0
    %360 = vmatpush1.msra.mxu0 0.0
    %361 = vmatprep.subr.mxu0 0.0
    %362 = vmatpush1.msra.mxu0 0.0
    %363 = vmatprep.subr.mxu0 0.0
    %364 = vmatpush1.msra.mxu0 0.0
    %365 = vmatprep.subr.mxu0 0.0
    %366 = vmatpush1.msra.mxu0 0.0
    %367 = vmatprep.subr.mxu0 0.0
    %368 = vmatpush1.msra.mxu0 0.0
    %369 = vmatprep.subr.mxu0 0.0
    %370 = vmatpush1.msra.mxu0 0.0
    %371 = vmatprep.subr.mxu0 0.0
    %372 = vmatpush1.msra.mxu0 0.0
    %373 = vmatprep.subr.mxu0 0.0
    %374 = vmatpush1.msra.mxu0 0.0
    %375 = vmatprep.subr.mxu0 0.0
    %376 = vmatpush1.msra.mxu0 0.0
    %377 = vmatprep.subr.mxu0 0.0
    %378 = vmatpush1.msra.mxu0 0.0
    %379 = vmatprep.subr.mxu0 0.0
    %380 = vmatpush1.msra.mxu0 0.0
    %381 = vmatprep.subr.mxu0 0.0
    %382 = vmatpush1.msra.mxu0 0.0
    %383 = vmatprep.subr.mxu0 0.0
    %384 = vmatpush1.msra.mxu0 0.0
    %385 = vmatprep.subr.mxu0 0.0
    %386 = vmatpush1.msra.mxu0 0.0
    %387 = vmatprep.subr.mxu0 0.0
    %388 = vmatpush1.msra.mxu0 0.0
    %389 = vmatprep.subr.mxu0 0.0
    %390 = vmatpush1.msra.mxu0 0.0
    %391 = vmatprep.subr.mxu0 0.0
    %392 = vmatpush1.msra.mxu0 0.0
    %393 = vmatprep.subr.mxu0 0.0
    %394 = vmatpush1.msra.mxu0 0.0
    %395 = vmatprep.subr.mxu0 0.0
    %396 = vmatpush1.msra.mxu0 0.0
    %397 = vmatprep.subr.mxu0 0.0
    %398 = vmatpush1.msra.mxu0 0.0
    %399 = vmatprep.subr.mxu0 0.0
    %400 = vmatpush1.msra.mxu0 0.0
    %401 = vmatprep.mubr.f32.mxu0 0.0
    %402 = vmatmul.mubr.f32.gmra.mrb[0].mxu0 %v335
    %v403 = vpop.f32.mrb[0].mxu0
    %v404 = vadd.f32 %v331, %v403
    %v405 = vpop.f32.mrb[0].mxu0
    %v406 = vadd.f32 %v331, %v405
    %407 = vdwg.mxu0
    %v408 = vlaneseq
    %v409 = vand.u32 %v408, 127
    %v410 = vadd.s32 %v409, 128
    %v411 = vlaneseq
    %v412 = vshrl.u32 %v411, 7
    %v413 = vmul.u32 %v412, 128
    %vm414 = vcmp.ge.s32.totalorder %v409, %v413
    %vm415 = vcmp.ge.s32.totalorder %v410, %v413
    %v416 = vadd.s32 %v413, 16
    %vm417 = vcmp.lt.s32.totalorder %v409, %v416
    %vm418 = vcmp.lt.s32.totalorder %v410, %v416
    %vm419 = vmand %vm414, %vm417
    %vm420 = vmand %vm415, %vm418
    %v421 = vsel %vm419, 1.0, 0.0
    %v422 = vsel %vm420, 1.0, 0.0
    %v423 = vsel %vm68, %v421, 0.0
    %v424 = vrot.slane %v423, 4
    %v425 = vadd.f32 %v423, %v424
    %v426 = vrot.slane %v425, 2
    %v427 = vadd.f32 %v425, %v426
    %v428 = vrot.slane %v427, 1
    %v429 = vadd.f32 %v427, %v428
    %vm430 = vcmask 1025024
    %v431 = vsel %vm430, %v422, 0.0
    %v432 = vrot.slane %v431, 4
    %v433 = vadd.f32 %v431, %v432
    %v434 = vrot.slane %v433, 2
    %v435 = vadd.f32 %v433, %v434
    %v436 = vrot.slane %v435, 1
    %v437 = vadd.f32 %v435, %v436
    %vm438 = vcmp.gt.f32.partialorder %v421, 0.0
    %vm439 = vcmp.gt.f32.partialorder %v422, 0.0
    %v440 = vsel %vm438, 1, 0
    %v441 = vsel %vm439, 1, 0
    %v442 = vlaneseq
    %v443 = vshrl.u32 %v442, 7
    %v444 = vsub.s32 0, %v443
    %v445 = vrot.slane %v440, %v444
    %v446 = vlaneseq
    %v447 = vshrl.u32 %v446, 7
    %v448 = vsub.s32 0, %v447
    %v449 = vrot.slane %v441, %v448
    %vm450 = vcmp.eq.s32.totalorder %v445, 1
    %vm451 = vcmp.eq.s32.totalorder %v449, 1
    %v452 = vsel %vm450, %v404, -1e+30
    %v453 = vsel %vm451, %v406, -1e+30
    %vm454 = vcmask 1031168
    %v455 = vsel %vm454, %v453, -inf
    %v456 = vmax.f32 %v452, %v455
    %457 = vmax.xlane.f32.xlu0 %v456
    %v458 = vpop.xlane.xlu0 %457
    %v459 = vlaneseq
    %v460 = vshrl.u32 %v459, 7
    %v461 = vsub.s32 0, %v460
    %v462 = vrot.slane %v421, %v461
    %v463 = vlaneseq
    %v464 = vshrl.u32 %v463, 7
    %v465 = vsub.s32 0, %v464
    %v466 = vrot.slane %v422, %v465
    %v467 = vmul.f32 %v458, %v462
    %v468 = vmul.f32 %v458, %v466
    %v469 = vadd.f32 %v467, 0.0
    %v470 = vadd.f32 %v468, 0.0
    %v471 = vlaneseq
    %v472 = vshrl.u32 %v471, 7
    %v473 = vsub.s32 1, %v472
    %v474 = vrot.slane %v440, %v473
    %v475 = vlaneseq
    %v476 = vshrl.u32 %v475, 7
    %v477 = vsub.s32 1, %v476
    %v478 = vrot.slane %v441, %v477
    %vm479 = vcmp.eq.s32.totalorder %v474, 1
    %vm480 = vcmp.eq.s32.totalorder %v478, 1
    %v481 = vsel %vm479, %v404, -1e+30
    %v482 = vsel %vm480, %v406, -1e+30
    %v483 = vsel %vm454, %v482, -inf
    %v484 = vmax.f32 %v481, %v483
    %485 = vmax.xlane.f32.xlu0 %v484
    %v486 = vpop.xlane.xlu0 %485
    %v487 = vlaneseq
    %v488 = vshrl.u32 %v487, 7
    %v489 = vsub.s32 1, %v488
    %v490 = vrot.slane %v421, %v489
    %v491 = vlaneseq
    %v492 = vshrl.u32 %v491, 7
    %v493 = vsub.s32 1, %v492
    %v494 = vrot.slane %v422, %v493
    %v495 = vmul.f32 %v486, %v490
    %v496 = vmul.f32 %v486, %v494
    %v497 = vadd.f32 %v469, %v495
    %v498 = vadd.f32 %v470, %v496
    %vm499 = vcmp.gt.f32.partialorder %v429, 0.0
    %vm500 = vcmp.gt.f32.partialorder %v437, 0.0
    %v501 = vsub.f32 %v404, %v497
    %v502 = vsub.f32 %v406, %v498
    %v503 = vsel %vm499, 1, 0
    %v504 = vsel %vm500, 1, 0
    %vm505 = vcmp.eq.s32.totalorder %v503, 1
    %vm506 = vcmp.eq.s32.totalorder %v504, 1
    %v507 = vsel %vm505, %v501, -1e+30
    %v508 = vsel %vm506, %v502, -1e+30
    %v509 = vmul.f32 %v507, 1.442695
    %v510 = vpow.pop %v509
    %v511 = vmul.f32 %v508, 1.442695
    %v512 = vpow.pop %v511
    %v514 = vsel %vm454, %v512, 0
    %v517 = vsel %vm454, %v422, 0
    %519 = vmatprep.subr.mxu0 %v517
    %520 = vmatpush1.xpose.msra.mxu0 %v421
    %521 = vmatprep.subr.mxu0 0.0
    %522 = vmatpush1.xpose.msra.mxu0 0.0
    %523 = vmatprep.subr.mxu0 0.0
    %524 = vmatpush1.xpose.msra.mxu0 0.0
    %525 = vmatprep.subr.mxu0 0.0
    %526 = vmatpush1.xpose.msra.mxu0 0.0
    %527 = vmatprep.subr.mxu0 0.0
    %528 = vmatpush1.xpose.msra.mxu0 0.0
    %529 = vmatprep.subr.mxu0 0.0
    %530 = vmatpush1.xpose.msra.mxu0 0.0
    %531 = vmatprep.subr.mxu0 0.0
    %532 = vmatpush1.xpose.msra.mxu0 0.0
    %533 = vmatprep.subr.mxu0 0.0
    %534 = vmatpush1.xpose.msra.mxu0 0.0
    %535 = vmatprep.subr.mxu0 0.0
    %536 = vmatpush1.xpose.msra.mxu0 0.0
    %537 = vmatprep.subr.mxu0 0.0
    %538 = vmatpush1.xpose.msra.mxu0 0.0
    %539 = vmatprep.subr.mxu0 0.0
    %540 = vmatpush1.xpose.msra.mxu0 0.0
    %541 = vmatprep.subr.mxu0 0.0
    %542 = vmatpush1.xpose.msra.mxu0 0.0
    %543 = vmatprep.subr.mxu0 0.0
    %544 = vmatpush1.xpose.msra.mxu0 0.0
    %545 = vmatprep.subr.mxu0 0.0
    %546 = vmatpush1.xpose.msra.mxu0 0.0
    %547 = vmatprep.subr.mxu0 0.0
    %548 = vmatpush1.xpose.msra.mxu0 0.0
    %549 = vmatprep.subr.mxu0 0.0
    %550 = vmatpush1.xpose.msra.mxu0 0.0
    %551 = vmatprep.subr.mxu0 0.0
    %552 = vmatpush1.xpose.msra.mxu0 0.0
    %553 = vmatprep.subr.mxu0 0.0
    %554 = vmatpush1.xpose.msra.mxu0 0.0
    %555 = vmatprep.subr.mxu0 0.0
    %556 = vmatpush1.xpose.msra.mxu0 0.0
    %557 = vmatprep.subr.mxu0 0.0
    %558 = vmatpush1.xpose.msra.mxu0 0.0
    %559 = vmatprep.subr.mxu0 0.0
    %560 = vmatpush1.xpose.msra.mxu0 0.0
    %561 = vmatprep.subr.mxu0 0.0
    %562 = vmatpush1.xpose.msra.mxu0 0.0
    %563 = vmatprep.subr.mxu0 0.0
    %564 = vmatpush1.xpose.msra.mxu0 0.0
    %565 = vmatprep.subr.mxu0 0.0
    %566 = vmatpush1.xpose.msra.mxu0 0.0
    %567 = vmatprep.subr.mxu0 0.0
    %568 = vmatpush1.xpose.msra.mxu0 0.0
    %569 = vmatprep.subr.mxu0 0.0
    %570 = vmatpush1.xpose.msra.mxu0 0.0
    %571 = vmatprep.subr.mxu0 0.0
    %572 = vmatpush1.xpose.msra.mxu0 0.0
    %573 = vmatprep.subr.mxu0 0.0
    %574 = vmatpush1.xpose.msra.mxu0 0.0
    %575 = vmatprep.subr.mxu0 0.0
    %576 = vmatpush1.xpose.msra.mxu0 0.0
    %577 = vmatprep.subr.mxu0 0.0
    %578 = vmatpush1.xpose.msra.mxu0 0.0
    %579 = vmatprep.subr.mxu0 0.0
    %580 = vmatpush1.xpose.msra.mxu0 0.0
    %581 = vmatprep.subr.mxu0 0.0
    %582 = vmatpush1.xpose.msra.mxu0 0.0
    %583 = vmatprep.mubr.f32.mxu0 %v514
    %584 = vmatmul.mubr.f32.gmra.mrb[0].mxu0 %v510
    %v585 = vpop.f32.mrb[0].mxu0
    %v586 = vadd.f32 0.0, %v585
    %v587 = vpop.f32.mrb[0].mxu0
    %588 = vdwg.mxu0
    %v589 = vrcp.pop %v586
    %v590 = vmul.f32 %v586, %v589
    %v591 = vsub.f32 2.0, %v590
    %v592 = vmul.f32 %v589, %v591
    %vm593 = vcmask 15360
    %v595 = vsel %vm593, %v592, 0
    %v598 = vsel %vm68, %v421, 0
    %v600 = vsel %vm68, %v422, 0
    %602 = vmatprep.subr.mxu0 %v600
    %603 = vmatpush1.msra.mxu0 %v598
    %604 = vmatprep.subr.mxu0 0.0
    %605 = vmatpush1.msra.mxu0 0.0
    %606 = vmatprep.subr.mxu0 0.0
    %607 = vmatpush1.msra.mxu0 0.0
    %608 = vmatprep.subr.mxu0 0.0
    %609 = vmatpush1.msra.mxu0 0.0
    %610 = vmatprep.subr.mxu0 0.0
    %611 = vmatpush1.msra.mxu0 0.0
    %612 = vmatprep.subr.mxu0 0.0
    %613 = vmatpush1.msra.mxu0 0.0
    %614 = vmatprep.subr.mxu0 0.0
    %615 = vmatpush1.msra.mxu0 0.0
    %616 = vmatprep.subr.mxu0 0.0
    %617 = vmatpush1.msra.mxu0 0.0
    %618 = vmatprep.subr.mxu0 0.0
    %619 = vmatpush1.msra.mxu0 0.0
    %620 = vmatprep.subr.mxu0 0.0
    %621 = vmatpush1.msra.mxu0 0.0
    %622 = vmatprep.subr.mxu0 0.0
    %623 = vmatpush1.msra.mxu0 0.0
    %624 = vmatprep.subr.mxu0 0.0
    %625 = vmatpush1.msra.mxu0 0.0
    %626 = vmatprep.subr.mxu0 0.0
    %627 = vmatpush1.msra.mxu0 0.0
    %628 = vmatprep.subr.mxu0 0.0
    %629 = vmatpush1.msra.mxu0 0.0
    %630 = vmatprep.subr.mxu0 0.0
    %631 = vmatpush1.msra.mxu0 0.0
    %632 = vmatprep.subr.mxu0 0.0
    %633 = vmatpush1.msra.mxu0 0.0
    %634 = vmatprep.subr.mxu0 0.0
    %635 = vmatpush1.msra.mxu0 0.0
    %636 = vmatprep.subr.mxu0 0.0
    %637 = vmatpush1.msra.mxu0 0.0
    %638 = vmatprep.subr.mxu0 0.0
    %639 = vmatpush1.msra.mxu0 0.0
    %640 = vmatprep.subr.mxu0 0.0
    %641 = vmatpush1.msra.mxu0 0.0
    %642 = vmatprep.subr.mxu0 0.0
    %643 = vmatpush1.msra.mxu0 0.0
    %644 = vmatprep.subr.mxu0 0.0
    %645 = vmatpush1.msra.mxu0 0.0
    %646 = vmatprep.subr.mxu0 0.0
    %647 = vmatpush1.msra.mxu0 0.0
    %648 = vmatprep.subr.mxu0 0.0
    %649 = vmatpush1.msra.mxu0 0.0
    %650 = vmatprep.subr.mxu0 0.0
    %651 = vmatpush1.msra.mxu0 0.0
    %652 = vmatprep.subr.mxu0 0.0
    %653 = vmatpush1.msra.mxu0 0.0
    %654 = vmatprep.subr.mxu0 0.0
    %655 = vmatpush1.msra.mxu0 0.0
    %656 = vmatprep.subr.mxu0 0.0
    %657 = vmatpush1.msra.mxu0 0.0
    %658 = vmatprep.subr.mxu0 0.0
    %659 = vmatpush1.msra.mxu0 0.0
    %660 = vmatprep.subr.mxu0 0.0
    %661 = vmatpush1.msra.mxu0 0.0
    %662 = vmatprep.subr.mxu0 0.0
    %663 = vmatpush1.msra.mxu0 0.0
    %664 = vmatprep.subr.mxu0 0.0
    %665 = vmatpush1.msra.mxu0 0.0
    %666 = vmatprep.mubr.f32.mxu0 0.0
    %667 = vmatmul.mubr.f32.gmra.mrb[0].mxu0 %v595
    %v668 = vpop.f32.mrb[0].mxu0
    %v669 = vadd.f32 0.0, %v668
    %v670 = vpop.f32.mrb[0].mxu0
    %v671 = vadd.f32 0.0, %v670
    %672 = vdwg.mxu0
    %v673 = vmul.f32 %v510, %v669
    %v674 = vmul.f32 %v512, %v671
    %v676 = vsel %vm454, %v674, 0
    %678 = vmatprep.subr.mxu0 %v676
    %679 = vmatpush1.xpose.msra.mxu0 %v673
    %680 = vmatprep.subr.mxu0 0.0
    %681 = vmatpush1.xpose.msra.mxu0 0.0
    %682 = vmatprep.subr.mxu0 0.0
    %683 = vmatpush1.xpose.msra.mxu0 0.0
    %684 = vmatprep.subr.mxu0 0.0
    %685 = vmatpush1.xpose.msra.mxu0 0.0
    %686 = vmatprep.subr.mxu0 0.0
    %687 = vmatpush1.xpose.msra.mxu0 0.0
    %688 = vmatprep.subr.mxu0 0.0
    %689 = vmatpush1.xpose.msra.mxu0 0.0
    %690 = vmatprep.subr.mxu0 0.0
    %691 = vmatpush1.xpose.msra.mxu0 0.0
    %692 = vmatprep.subr.mxu0 0.0
    %693 = vmatpush1.xpose.msra.mxu0 0.0
    %694 = vmatprep.subr.mxu0 0.0
    %695 = vmatpush1.xpose.msra.mxu0 0.0
    %696 = vmatprep.subr.mxu0 0.0
    %697 = vmatpush1.xpose.msra.mxu0 0.0
    %698 = vmatprep.subr.mxu0 0.0
    %699 = vmatpush1.xpose.msra.mxu0 0.0
    %700 = vmatprep.subr.mxu0 0.0
    %701 = vmatpush1.xpose.msra.mxu0 0.0
    %702 = vmatprep.subr.mxu0 0.0
    %703 = vmatpush1.xpose.msra.mxu0 0.0
    %704 = vmatprep.subr.mxu0 0.0
    %705 = vmatpush1.xpose.msra.mxu0 0.0
    %706 = vmatprep.subr.mxu0 0.0
    %707 = vmatpush1.xpose.msra.mxu0 0.0
    %708 = vmatprep.subr.mxu0 0.0
    %709 = vmatpush1.xpose.msra.mxu0 0.0
    %710 = vmatprep.subr.mxu0 0.0
    %711 = vmatpush1.xpose.msra.mxu0 0.0
    %712 = vmatprep.subr.mxu0 0.0
    %713 = vmatpush1.xpose.msra.mxu0 0.0
    %714 = vmatprep.subr.mxu0 0.0
    %715 = vmatpush1.xpose.msra.mxu0 0.0
    %716 = vmatprep.subr.mxu0 0.0
    %717 = vmatpush1.xpose.msra.mxu0 0.0
    %718 = vmatprep.subr.mxu0 0.0
    %719 = vmatpush1.xpose.msra.mxu0 0.0
    %720 = vmatprep.subr.mxu0 0.0
    %721 = vmatpush1.xpose.msra.mxu0 0.0
    %722 = vmatprep.subr.mxu0 0.0
    %723 = vmatpush1.xpose.msra.mxu0 0.0
    %724 = vmatprep.subr.mxu0 0.0
    %725 = vmatpush1.xpose.msra.mxu0 0.0
    %726 = vmatprep.subr.mxu0 0.0
    %727 = vmatpush1.xpose.msra.mxu0 0.0
    %728 = vmatprep.subr.mxu0 0.0
    %729 = vmatpush1.xpose.msra.mxu0 0.0
    %730 = vmatprep.subr.mxu0 0.0
    %731 = vmatpush1.xpose.msra.mxu0 0.0
    %732 = vmatprep.subr.mxu0 0.0
    %733 = vmatpush1.xpose.msra.mxu0 0.0
    %734 = vmatprep.subr.mxu0 0.0
    %735 = vmatpush1.xpose.msra.mxu0 0.0
    %736 = vmatprep.subr.mxu0 0.0
    %737 = vmatpush1.xpose.msra.mxu0 0.0
    %738 = vmatprep.subr.mxu0 0.0
    %739 = vmatpush1.xpose.msra.mxu0 0.0
    %740 = vmatprep.subr.mxu0 0.0
    %741 = vmatpush1.xpose.msra.mxu0 0.0
    %742 = vmatprep.mubr.f32.mxu0 %v517
    %743 = vmatmul.mubr.f32.gmra.mrb[0].mxu0 %v421
    %v744 = vpop.f32.mrb[0].mxu0
    %v745 = vadd.f32 0.0, %v744
    %v746 = vpop.f32.mrb[0].mxu0
    %747 = vdwg.mxu0
    %vm748 = vcmask 64512
    %v750 = vsel %vm748, %v745, 0
    %752 = vmatprep.subr.mxu0 0.0
    %753 = vmatpush1.msra.mxu0 %v29
    %754 = vmatprep.subr.mxu0 0.0
    %755 = vmatpush1.msra.mxu0 0.0
    %756 = vmatprep.subr.mxu0 0.0
    %757 = vmatpush1.msra.mxu0 0.0
    %758 = vmatprep.subr.mxu0 0.0
    %759 = vmatpush1.msra.mxu0 0.0
    %760 = vmatprep.subr.mxu0 0.0
    %761 = vmatpush1.msra.mxu0 0.0
    %762 = vmatprep.subr.mxu0 0.0
    %763 = vmatpush1.msra.mxu0 0.0
    %764 = vmatprep.subr.mxu0 0.0
    %765 = vmatpush1.msra.mxu0 0.0
    %766 = vmatprep.subr.mxu0 0.0
    %767 = vmatpush1.msra.mxu0 0.0
    %768 = vmatprep.subr.mxu0 0.0
    %769 = vmatpush1.msra.mxu0 0.0
    %770 = vmatprep.subr.mxu0 0.0
    %771 = vmatpush1.msra.mxu0 0.0
    %772 = vmatprep.subr.mxu0 0.0
    %773 = vmatpush1.msra.mxu0 0.0
    %774 = vmatprep.subr.mxu0 0.0
    %775 = vmatpush1.msra.mxu0 0.0
    %776 = vmatprep.subr.mxu0 0.0
    %777 = vmatpush1.msra.mxu0 0.0
    %778 = vmatprep.subr.mxu0 0.0
    %779 = vmatpush1.msra.mxu0 0.0
    %780 = vmatprep.subr.mxu0 0.0
    %781 = vmatpush1.msra.mxu0 0.0
    %782 = vmatprep.subr.mxu0 0.0
    %783 = vmatpush1.msra.mxu0 0.0
    %784 = vmatprep.subr.mxu0 0.0
    %785 = vmatpush1.msra.mxu0 0.0
    %786 = vmatprep.subr.mxu0 0.0
    %787 = vmatpush1.msra.mxu0 0.0
    %788 = vmatprep.subr.mxu0 0.0
    %789 = vmatpush1.msra.mxu0 0.0
    %790 = vmatprep.subr.mxu0 0.0
    %791 = vmatpush1.msra.mxu0 0.0
    %792 = vmatprep.subr.mxu0 0.0
    %793 = vmatpush1.msra.mxu0 0.0
    %794 = vmatprep.subr.mxu0 0.0
    %795 = vmatpush1.msra.mxu0 0.0
    %796 = vmatprep.subr.mxu0 0.0
    %797 = vmatpush1.msra.mxu0 0.0
    %798 = vmatprep.subr.mxu0 0.0
    %799 = vmatpush1.msra.mxu0 0.0
    %800 = vmatprep.subr.mxu0 0.0
    %801 = vmatpush1.msra.mxu0 0.0
    %802 = vmatprep.subr.mxu0 0.0
    %803 = vmatpush1.msra.mxu0 0.0
    %804 = vmatprep.subr.mxu0 0.0
    %805 = vmatpush1.msra.mxu0 0.0
    %806 = vmatprep.subr.mxu0 0.0
    %807 = vmatpush1.msra.mxu0 0.0
    %808 = vmatprep.subr.mxu0 0.0
    %809 = vmatpush1.msra.mxu0 0.0
    %810 = vmatprep.subr.mxu0 0.0
    %811 = vmatpush1.msra.mxu0 0.0
    %812 = vmatprep.subr.mxu0 0.0
    %813 = vmatpush1.msra.mxu0 0.0
    %814 = vmatprep.subr.mxu0 0.0
    %815 = vmatpush1.msra.mxu0 0.0
    %816 = vmatprep.mubr.f32.mxu0 0.0
    %817 = vmatmul.mubr.f32.gmra.mrb[0].mxu0 %v750
    %v818 = vpop.f32.mrb[0].mxu0
    %v819 = vadd.f32 0.0, %v818
    %v820 = vpop.f32.mrb[0].mxu0
    %821 = vdwg.mxu0
    %vm822 = vcmask 254976
    %823 = vst.msk [vmem:[#allocation2] sm:$0x3] %vm822, %v819
    // Predicated region
    $region14: #{gst_forward.1} parent=1 // pred_check
      _
    $region15: #{gst_forward.1} parent=1 // pred_check_branch
      %825 = sbr.rel (0) target = $region17
    $region16: #{gst_forward.1} parent=1 // pred_region
      %s827 = ssub.s32 32, 32
      %828 = vsyncadd [#allocation3], %s827
      %s830 = sshll.u32 [#allocation2], 4
      %s831 = int_to_ptr.vmem [resolvable:$true] %s830
      %833 = dma.vmem_to_hbm [thread:$0]  %s831, 32, %s3, [#allocation3]
    $region17: #{gst_forward.1} parent=1 // pred_fallthru
      _
    // Predicated region
    $region18: #{gst_forward.1} parent=1 // pred_check
      _
    $region19: #{gst_forward.1} parent=1 // pred_check_branch
      %835 = sbr.rel (0) target = $region21
    $region20: #{gst_forward.1} parent=1 // pred_region
      %836 = dma.done [#allocation3], 32
    $region21: #{gst_forward.1} parent=1 // pred_fallthru
      _
    %837 = vsyncpa [#allocation3], 1

</llo_original>
